<compile_context>
chip_gen: v6e
topology: v6e:2x2x1
jax: 0.10.0
libtpu: 0.0.40
codegen_flags: <defaults>
</compile_context>

<pallas_src>
import jax
import jax.numpy as jnp
from jax.experimental import pallas as pl
from jax.experimental.pallas import tpu as pltpu


def _mlp_kernel(x_ref, w1_ref, b1_ref, w2_ref, b2_ref, w3_ref, b3_ref, o_ref):
    """One batch tile: x (TB, 256) f32 -> o (TB, 1) termination probabilities."""
    # fc1 + ReLU  (bf16 MXU matmul, f32 accumulation; bias/ReLU in f32)
    x = x_ref[...].astype(jnp.bfloat16)
    h1 = jnp.dot(x, w1_ref[...], preferred_element_type=jnp.float32)
    h1 = jnp.maximum(h1 + b1_ref[...], 0.0)
    # fc2 + ReLU
    h2 = jnp.dot(h1.astype(jnp.bfloat16), w2_ref[...],
                 preferred_element_type=jnp.float32)
    h2 = jnp.maximum(h2 + b2_ref[...], 0.0)
    # fc3 + Sigmoid in canonical (M,K)x(K,N) orientation -> (TB, 1).
    z = jnp.dot(h2.astype(jnp.bfloat16), w3_ref[...],
                preferred_element_type=jnp.float32)
    z = z + b3_ref[0, 0]                      # scalar bias from SMEM
    o_ref[...] = jax.nn.sigmoid(z).astype(o_ref.dtype)


def _round_up(n, m):
    return ((n + m - 1) // m) * m


def termination_predictor(x, params):
    """x: (B, 256) float32.  Returns (B, 1) float32 probabilities in [0, 1]."""
    w1, b1, w2, b2, w3, b3 = params
    B = x.shape[0]

    # Batch tile selection:
    #  * B <= 1024: one full-extent tile (always a legal block shape).
    #  * B  > 1024: split into >= 2 tiles (v7x has 2 TCs and the grid axis is
    #    "parallel"), tiles multiple of 128 rows, capped at 2048 rows so the
    #    per-step x DMA is ~2 MiB (f32) and VMEM use stays small on every
    #    generation (v5e 16 MiB / v7x 32 MiB scoped defaults).
    if B <= 1024:
        TB = B
    else:
        TB = min(2048, _round_up(pl.cdiv(B, 2), 128))
    G = pl.cdiv(B, TB)        # ragged last block handled by Pallas (no jnp.pad)

    # One-time tiny cast of the weights to bf16 (resident in VMEM afterwards).
    w1b = w1.astype(jnp.bfloat16)
    w2b = w2.astype(jnp.bfloat16)
    w3b = w3.astype(jnp.bfloat16)

    cost = pl.CostEstimate(
        flops=2 * B * (256 * 128 + 128 * 64 + 64),
        transcendentals=2 * B,                      # sigmoid ~= exp + reciprocal
        bytes_accessed=(B * 256 * 4 + B * 4
                        + 2 * (256 * 128 + 128 * 64 + 64)
                        + 4 * (128 + 64 + 1)),
    )

    out = pl.pallas_call(
        _mlp_kernel,
        out_shape=jax.ShapeDtypeStruct((B, 1), jnp.float32),
        grid_spec=pltpu.PrefetchScalarGridSpec(
            num_scalar_prefetch=0,
            grid=(G,),
            in_specs=[
                pl.BlockSpec((TB, 256), lambda i: (i, 0)),          # x: tiled
                pl.BlockSpec((256, 128), lambda i: (0, 0)),         # w1 resident
                pl.BlockSpec((1, 128), lambda i: (0, 0)),           # b1 resident
                pl.BlockSpec((128, 64), lambda i: (0, 0)),          # w2 resident
                pl.BlockSpec((1, 64), lambda i: (0, 0)),            # b2 resident
                pl.BlockSpec((64, 1), lambda i: (0, 0)),            # w3 column
                pl.BlockSpec(memory_space=pltpu.MemorySpace.SMEM),  # b3 scalar
            ],
            out_specs=pl.BlockSpec((TB, 1), lambda i: (i, 0)),
        ),
        compiler_params=pltpu.CompilerParams(
            dimension_semantics=("parallel",)),   # shard batch tiles across TCs
        cost_estimate=cost,
    )(x, w1b, b1, w2b, b2, w3b, b3)

    return out


def init_params(key):
    """Deterministic synthetic init mimicking PyTorch nn.Linear defaults
    (uniform(-1/sqrt(fan_in), 1/sqrt(fan_in))).  Weights stored as (in, out)."""
    dims = [(256, 128), (128, 64), (64, 1)]
    params = []
    for fan_in, fan_out in dims:
        key, kw, kb = jax.random.split(key, 3)
        bound = 1.0 / jnp.sqrt(fan_in)
        w = jax.random.uniform(kw, (fan_in, fan_out), jnp.float32, -bound, bound)
        b = jax.random.uniform(kb, (1, fan_out), jnp.float32, -bound, bound)
        params.extend([w, b])
    return tuple(params)    # (w1, b1, w2, b2, w3, b3)


def reference(x, params):
    """Pure-JAX f32 reference matching the PyTorch forward."""
    w1, b1, w2, b2, w3, b3 = params
    h1 = jnp.maximum(x @ w1 + b1, 0.0)
    h2 = jnp.maximum(h1 @ w2 + b2, 0.0)
    return jax.nn.sigmoid(h2 @ w3 + b3)


if __name__ == "__main__":
    key = jax.random.PRNGKey(0)
    key, kx = jax.random.split(key)
    params = init_params(key)

    # Small batch: single full-extent tile (G = 1).
    B = 8
    x = jax.random.normal(kx, (B, 256), jnp.float32)
    out = jax.block_until_ready(termination_predictor(x, params))
    ref = reference(x, params)
    assert out.shape == (B, 1), out.shape
    # bf16 matmuls with f32 accumulation -> looser tolerance than pure f32.
    assert jnp.allclose(out, ref, atol=5e-3, rtol=5e-3), (
        float(jnp.max(jnp.abs(out - ref))))

    # Batch that exercises the multi-tile grid + ragged last block
    # (B=1500 -> TB=768, G=2, last block has 732 valid rows).
    B2 = 1500
    x2 = jax.random.normal(jax.random.PRNGKey(1), (B2, 256), jnp.float32)
    out2 = jax.block_until_ready(termination_predictor(x2, params))
    ref2 = reference(x2, params)
    assert out2.shape == (B2, 1), out2.shape
    assert jnp.allclose(out2, ref2, atol=5e-3, rtol=5e-3), (
        float(jnp.max(jnp.abs(out2 - ref2))))

    print("KERNEL_OK")
</pallas_src>

<mosaic_0001>
module attributes {stable_mosaic.version = 11 : i64} {
  func.func @_mlp_kernel(%arg0: i32, %arg1: memref<8x256xf32, #tpu.memory_space<vmem>>, %arg2: memref<256x128xbf16, #tpu.memory_space<vmem>>, %arg3: memref<1x128xf32, #tpu.memory_space<vmem>>, %arg4: memref<128x64xbf16, #tpu.memory_space<vmem>>, %arg5: memref<1x64xf32, #tpu.memory_space<vmem>>, %arg6: memref<64x1xbf16, #tpu.memory_space<vmem>>, %arg7: memref<1x1xf32, #tpu.memory_space<smem>>, %arg8: memref<8x1xf32, #tpu.memory_space<vmem>>) attributes {dimension_semantics = [#tpu.dimension_semantics<parallel>], iteration_bounds = array<i64: 1>, scalar_prefetch = 0 : i64, scratch_operands = 0 : i64, tpu.core_type = #tpu.core_type<tc>, window_params = [{transform_indices = @transform_0, window_bounds = array<i64: 8, 256>}, {pipeline_mode = #tpu.pipeline_mode<synchronous>, transform_indices = @transform_1, window_bounds = array<i64: 256, 128>}, {pipeline_mode = #tpu.pipeline_mode<synchronous>, transform_indices = @transform_2, window_bounds = array<i64: 1, 128>}, {pipeline_mode = #tpu.pipeline_mode<synchronous>, transform_indices = @transform_3, window_bounds = array<i64: 128, 64>}, {pipeline_mode = #tpu.pipeline_mode<synchronous>, transform_indices = @transform_4, window_bounds = array<i64: 1, 64>}, {pipeline_mode = #tpu.pipeline_mode<synchronous>, transform_indices = @transform_5, window_bounds = array<i64: 64, 1>}, {transform_indices = @transform_6, window_bounds = array<i64: 1, 1>}, {transform_indices = @transform_7, window_bounds = array<i64: 8, 1>}]} {
    %c0 = arith.constant 0 : index
    %c0_0 = arith.constant 0 : index
    %0 = vector.load %arg1[%c0, %c0_0] : memref<8x256xf32, #tpu.memory_space<vmem>>, vector<8x256xf32>
    %1 = arith.truncf %0 : vector<8x256xf32> to vector<8x256xbf16>
    %c0_1 = arith.constant 0 : index
    %c0_2 = arith.constant 0 : index
    %2 = vector.load %arg2[%c0_1, %c0_2] : memref<256x128xbf16, #tpu.memory_space<vmem>>, vector<256x128xbf16>
    %cst = arith.constant dense<0.000000e+00> : vector<8x128xf32>
    %3 = tpu.matmul %1, %2, %cst {dimension_numbers = #tpu.dot_dimension_numbers<[1], [0], [0], [1], [0, 0, 1, 1], [], []>} : vector<8x256xbf16>, vector<256x128xbf16>, vector<8x128xf32> -> vector<8x128xf32>
    %c0_3 = arith.constant 0 : index
    %c0_4 = arith.constant 0 : index
    %4 = vector.load %arg3[%c0_3, %c0_4] : memref<1x128xf32, #tpu.memory_space<vmem>>, vector<1x128xf32>
    %5 = vector.broadcast %4 : vector<1x128xf32> to vector<8x128xf32>
    %6 = arith.addf %3, %5 : vector<8x128xf32>
    %cst_5 = arith.constant 0.000000e+00 : f32
    %7 = vector.broadcast %cst_5 : f32 to vector<8x128xf32>
    %8 = arith.maximumf %6, %7 : vector<8x128xf32>
    %9 = arith.truncf %8 : vector<8x128xf32> to vector<8x128xbf16>
    %c0_6 = arith.constant 0 : index
    %c0_7 = arith.constant 0 : index
    %10 = vector.load %arg4[%c0_6, %c0_7] : memref<128x64xbf16, #tpu.memory_space<vmem>>, vector<128x64xbf16>
    %cst_8 = arith.constant dense<0.000000e+00> : vector<8x64xf32>
    %11 = tpu.matmul %9, %10, %cst_8 {dimension_numbers = #tpu.dot_dimension_numbers<[1], [0], [0], [1], [0, 0, 1, 1], [], []>} : vector<8x128xbf16>, vector<128x64xbf16>, vector<8x64xf32> -> vector<8x64xf32>
    %c0_9 = arith.constant 0 : index
    %c0_10 = arith.constant 0 : index
    %12 = vector.load %arg5[%c0_9, %c0_10] : memref<1x64xf32, #tpu.memory_space<vmem>>, vector<1x64xf32>
    %13 = vector.broadcast %12 : vector<1x64xf32> to vector<8x64xf32>
    %14 = arith.addf %11, %13 : vector<8x64xf32>
    %cst_11 = arith.constant 0.000000e+00 : f32
    %15 = vector.broadcast %cst_11 : f32 to vector<8x64xf32>
    %16 = arith.maximumf %14, %15 : vector<8x64xf32>
    %17 = arith.truncf %16 : vector<8x64xf32> to vector<8x64xbf16>
    %c0_12 = arith.constant 0 : index
    %c0_13 = arith.constant 0 : index
    %18 = vector.load %arg6[%c0_12, %c0_13] : memref<64x1xbf16, #tpu.memory_space<vmem>>, vector<64x1xbf16>
    %cst_14 = arith.constant dense<0.000000e+00> : vector<8x1xf32>
    %19 = tpu.matmul %17, %18, %cst_14 {dimension_numbers = #tpu.dot_dimension_numbers<[1], [0], [0], [1], [0, 0, 1, 1], [], []>} : vector<8x64xbf16>, vector<64x1xbf16>, vector<8x1xf32> -> vector<8x1xf32>
    %c0_15 = arith.constant 0 : index
    %c0_16 = arith.constant 0 : index
    %20 = memref.load %arg7[%c0_15, %c0_16] : memref<1x1xf32, #tpu.memory_space<smem>>
    %21 = vector.broadcast %20 : f32 to vector<8x1xf32>
    %22 = arith.addf %19, %21 : vector<8x1xf32>
    %23 = arith.negf %22 : vector<8x1xf32>
    %24 = math.exp %23 : vector<8x1xf32>
    %cst_17 = arith.constant 1.000000e+00 : f32
    %25 = vector.broadcast %cst_17 : f32 to vector<8x1xf32>
    %26 = arith.addf %25, %24 : vector<8x1xf32>
    %27 = arith.divf %25, %26 : vector<8x1xf32>
    %c0_18 = arith.constant 0 : index
    %c0_19 = arith.constant 0 : index
    %28 = vector.load %arg8[%c0_18, %c0_19] : memref<8x1xf32, #tpu.memory_space<vmem>>, vector<8x1xf32>
    tpu.vector_store %arg8[%c0_18, %c0_19], %27 {strides = array<i32>} : memref<8x1xf32, #tpu.memory_space<vmem>>, vector<8x1xf32>,
    return
  }
  func.func @transform_0(%arg0: i32) -> (i32, i32) {
    %c0_i32 = arith.constant 0 : i32
    %c0_i32_0 = arith.constant 0 : i32
    return %arg0, %c0_i32 : i32, i32
  }
  func.func @transform_1(%arg0: i32) -> (i32, i32) {
    %c0_i32 = arith.constant 0 : i32
    %c0_i32_0 = arith.constant 0 : i32
    %c0_i32_1 = arith.constant 0 : i32
    return %c0_i32, %c0_i32_0 : i32, i32
  }
  func.func @transform_2(%arg0: i32) -> (i32, i32) {
    %c0_i32 = arith.constant 0 : i32
    %c0_i32_0 = arith.constant 0 : i32
    %c0_i32_1 = arith.constant 0 : i32
    return %c0_i32, %c0_i32_0 : i32, i32
  }
  func.func @transform_3(%arg0: i32) -> (i32, i32) {
    %c0_i32 = arith.constant 0 : i32
    %c0_i32_0 = arith.constant 0 : i32
    %c0_i32_1 = arith.constant 0 : i32
    return %c0_i32, %c0_i32_0 : i32, i32
  }
  func.func @transform_4(%arg0: i32) -> (i32, i32) {
    %c0_i32 = arith.constant 0 : i32
    %c0_i32_0 = arith.constant 0 : i32
    %c0_i32_1 = arith.constant 0 : i32
    return %c0_i32, %c0_i32_0 : i32, i32
  }
  func.func @transform_5(%arg0: i32) -> (i32, i32) {
    %c0_i32 = arith.constant 0 : i32
    %c0_i32_0 = arith.constant 0 : i32
    %c0_i32_1 = arith.constant 0 : i32
    return %c0_i32, %c0_i32_0 : i32, i32
  }
  func.func @transform_6(%arg0: i32) -> (i32, i32) {
    %c0_i32 = arith.constant 0 : i32
    %c0_i32_0 = arith.constant 0 : i32
    %c0_i32_1 = arith.constant 0 : i32
    return %c0_i32, %c0_i32_0 : i32, i32
  }
  func.func @transform_7(%arg0: i32) -> (i32, i32) {
    %c0_i32 = arith.constant 0 : i32
    %c0_i32_0 = arith.constant 0 : i32
    return %arg0, %c0_i32 : i32, i32
  }
}

</mosaic_0001>

<llo_original>
// kernel: tpu_custom_call.1
$region0: #{tpu_custom_call.1}
  #allocation0 [shape = 'u32[]', space=smem, size = 0x4, offset = 0x4, fixed_abs, tag = 'smem constant byte address 0x4 - core index']
  #allocation1 [shape = 'u32[144,128]{1,0:T(1,128)}', space=vmem, size = 0x12000, scoped, tag = 'internal scratch']
  #allocation2 [shape = 'f32[1,1]{1,0:T(1,128)S(6)}', space=smem, size = 0x200, scoped, tag = 'scoped memory for tpu_custom_call.1']
  %s0 = inlined_call_operand.hbm [shape: f32[8,256], index: 0, kind: input, shape index: {}]
  %s1 = inlined_call_operand.vmem [shape: bf16[256,128], index: 1, kind: input, shape index: {}]
  %s2 = inlined_call_operand.vmem [shape: f32[1,128], index: 2, kind: input, shape index: {}]
  %s3 = inlined_call_operand.vmem [shape: bf16[128,64], index: 3, kind: input, shape index: {}]
  %s4 = inlined_call_operand.vmem [shape: f32[1,64], index: 4, kind: input, shape index: {}]
  %s5 = inlined_call_operand.vmem [shape: bf16[64,1], index: 5, kind: input, shape index: {}]
  %s6 = inlined_call_operand.<no memory space> [shape: f32[1,1], index: 6, kind: input, shape index: {}]
  %s7 = inlined_call_operand.vmem [shape: f32[8,1], index: 7, kind: output, shape index: {}]
  %s8 = sld [smem:[#allocation0]]
  $region42: #{tpu_custom_call.1} parent=0
    _
  %s10 = ssub.s32 1, %s8
  %s11 = scalar_select 0, %s10, %s8
  %12 = sst [smem:[#allocation2]] %s6
  $region1: #{tpu_custom_call.1} parent=0
    #allocation3 [shape = 'u8[8192]{0}', space=vmem, size = 0x2000, scoped, tag = 'input window, operand 0, single buffered']
    #allocation4 [shape = 's32[1]{0}', space=sflag, size = 0x4, scoped, tag = 'scoped memory for tpu_custom_call.1']
    %13 = vsyncpa [#allocation4], 0
    // Predicated region
    $region2: #{tpu_custom_call.1} parent=1 // pred_check
      _
    $region3: #{tpu_custom_call.1} parent=1 // pred_check_branch
      %15 = sbr.rel (0) target = $region5
    $region4: #{tpu_custom_call.1} parent=1 // pred_region
      %s17 = ssub.s32 256, 256
      %18 = vsyncadd [#allocation4], %s17
      %s20 = sshll.u32 [#allocation3], 4
      %s21 = int_to_ptr.vmem [resolvable:$true] %s20
      %23 = dma.hbm_to_vmem [thread:$0]  %s0, 256, %s21, [#allocation4]
    $region5: #{tpu_custom_call.1} parent=1 // pred_fallthru
      _
    // Predicated region
    $region6: #{tpu_custom_call.1} parent=1 // pred_check
      _
    $region7: #{tpu_custom_call.1} parent=1 // pred_check_branch
      %25 = sbr.rel (0) target = $region9
    $region8: #{tpu_custom_call.1} parent=1 // pred_region
      _
    $region9: #{tpu_custom_call.1} parent=1 // pred_fallthru
      _
    // Predicated region
    $region10: #{tpu_custom_call.1} parent=1 // pred_check
      _
    $region11: #{tpu_custom_call.1} parent=1 // pred_check_branch
      %27 = sbr.rel (0) target = $region13
    $region12: #{tpu_custom_call.1} parent=1 // pred_region
      _
    $region13: #{tpu_custom_call.1} parent=1 // pred_fallthru
      _
    // Predicated region
    $region14: #{tpu_custom_call.1} parent=1 // pred_check
      _
    $region15: #{tpu_custom_call.1} parent=1 // pred_check_branch
      %29 = sbr.rel (0) target = $region17
    $region16: #{tpu_custom_call.1} parent=1 // pred_region
      _
    $region17: #{tpu_custom_call.1} parent=1 // pred_fallthru
      _
    // Predicated region
    $region18: #{tpu_custom_call.1} parent=1 // pred_check
      _
    $region19: #{tpu_custom_call.1} parent=1 // pred_check_branch
      %31 = sbr.rel (0) target = $region21
    $region20: #{tpu_custom_call.1} parent=1 // pred_region
      _
    $region21: #{tpu_custom_call.1} parent=1 // pred_fallthru
      _
    // Predicated region
    $region22: #{tpu_custom_call.1} parent=1 // pred_check
      _
    $region23: #{tpu_custom_call.1} parent=1 // pred_check_branch
      %33 = sbr.rel (0) target = $region25
    $region24: #{tpu_custom_call.1} parent=1 // pred_region
      _
    $region25: #{tpu_custom_call.1} parent=1 // pred_fallthru
      _
    // Predicated region
    $region26: #{tpu_custom_call.1} parent=1 // pred_check
      _
    $region27: #{tpu_custom_call.1} parent=1 // pred_check_branch
      %35 = sbr.rel (0) target = $region29
    $region28: #{tpu_custom_call.1} parent=1 // pred_region
      _
    $region29: #{tpu_custom_call.1} parent=1 // pred_fallthru
      _
    // Predicated region
    $region30: #{tpu_custom_call.1} parent=1 // pred_check
      _
    $region31: #{tpu_custom_call.1} parent=1 // pred_check_branch
      %37 = sbr.rel (0) target = $region33
    $region32: #{tpu_custom_call.1} parent=1 // pred_region
      %38 = dma.done [#allocation4], 256
    $region33: #{tpu_custom_call.1} parent=1 // pred_fallthru
      _
    %v40 = vld [vmem:[#allocation3] sm:$0xff]
    %v41 = vld [vmem:[#allocation3 + $0x8] sm:$0xff]
    %v42 = vpack.c.bf16 %v40, %v40
    %v43 = vpack.c.bf16 %v41, %v41
    %v44 = vld [vmem:[%s1] sm:$0xf]
    %v45 = vld [vmem:[%s1 + $0x4] sm:$0xf]
    %v46 = vld [vmem:[%s1 + $0x8] sm:$0xf]
    %v47 = vld [vmem:[%s1 + $0xc] sm:$0xf]
    %v48 = vld [vmem:[%s1 + $0x10] sm:$0xf]
    %v49 = vld [vmem:[%s1 + $0x14] sm:$0xf]
    %v50 = vld [vmem:[%s1 + $0x18] sm:$0xf]
    %v51 = vld [vmem:[%s1 + $0x1c] sm:$0xf]
    %v52 = vld [vmem:[%s1 + $0x20] sm:$0xf]
    %v53 = vld [vmem:[%s1 + $0x24] sm:$0xf]
    %v54 = vld [vmem:[%s1 + $0x28] sm:$0xf]
    %v55 = vld [vmem:[%s1 + $0x2c] sm:$0xf]
    %v56 = vld [vmem:[%s1 + $0x30] sm:$0xf]
    %v57 = vld [vmem:[%s1 + $0x34] sm:$0xf]
    %v58 = vld [vmem:[%s1 + $0x38] sm:$0xf]
    %v59 = vld [vmem:[%s1 + $0x3c] sm:$0xf]
    %v60 = vld [vmem:[%s1 + $0x40] sm:$0xf]
    %v61 = vld [vmem:[%s1 + $0x44] sm:$0xf]
    %v62 = vld [vmem:[%s1 + $0x48] sm:$0xf]
    %v63 = vld [vmem:[%s1 + $0x4c] sm:$0xf]
    %v64 = vld [vmem:[%s1 + $0x50] sm:$0xf]
    %v65 = vld [vmem:[%s1 + $0x54] sm:$0xf]
    %v66 = vld [vmem:[%s1 + $0x58] sm:$0xf]
    %v67 = vld [vmem:[%s1 + $0x5c] sm:$0xf]
    %v68 = vld [vmem:[%s1 + $0x60] sm:$0xf]
    %v69 = vld [vmem:[%s1 + $0x64] sm:$0xf]
    %v70 = vld [vmem:[%s1 + $0x68] sm:$0xf]
    %v71 = vld [vmem:[%s1 + $0x6c] sm:$0xf]
    %v72 = vld [vmem:[%s1 + $0x70] sm:$0xf]
    %v73 = vld [vmem:[%s1 + $0x74] sm:$0xf]
    %v74 = vld [vmem:[%s1 + $0x78] sm:$0xf]
    %v75 = vld [vmem:[%s1 + $0x7c] sm:$0xf]
    %v76 = vld [vmem:[%s2] sm:$0x1]
    %v78 = vlaneseq
    %v79 = vshrl.u32 %v78, 7
    %v80 = vsub.s32 0, %v79
    %v81 = vrot.slane %v76, %v80
    %v115 = vunpack.c.l.b16 %v44
    %v116 = vunpack.c.l.b16 %v45
    %v117 = vunpack.c.l.b16 %v46
    %v118 = vunpack.c.l.b16 %v47
    %v119 = vunpack.c.l.b16 %v48
    %v120 = vunpack.c.l.b16 %v49
    %v121 = vunpack.c.l.b16 %v50
    %v122 = vunpack.c.l.b16 %v51
    %v123 = vunpack.c.l.b16 %v52
    %v124 = vunpack.c.l.b16 %v53
    %v125 = vunpack.c.l.b16 %v54
    %v126 = vunpack.c.l.b16 %v55
    %v127 = vunpack.c.l.b16 %v56
    %v128 = vunpack.c.l.b16 %v57
    %v129 = vunpack.c.l.b16 %v58
    %v130 = vunpack.c.l.b16 %v59
    %v131 = vunpack.c.l.b16 %v60
    %v132 = vunpack.c.l.b16 %v61
    %v133 = vunpack.c.l.b16 %v62
    %v134 = vunpack.c.l.b16 %v63
    %v135 = vunpack.c.l.b16 %v64
    %v136 = vunpack.c.l.b16 %v65
    %v137 = vunpack.c.l.b16 %v66
    %v138 = vunpack.c.l.b16 %v67
    %v139 = vunpack.c.l.b16 %v68
    %v140 = vunpack.c.l.b16 %v69
    %v141 = vunpack.c.l.b16 %v70
    %v142 = vunpack.c.l.b16 %v71
    %v143 = vunpack.c.l.b16 %v72
    %v144 = vunpack.c.l.b16 %v73
    %v145 = vunpack.c.l.b16 %v74
    %v146 = vunpack.c.l.b16 %v75
    %v147 = vpack.c.b16 %v116, %v115
    %v148 = vpack.c.b16 %v118, %v117
    %v149 = vpack.c.b16 %v120, %v119
    %v150 = vpack.c.b16 %v122, %v121
    %v151 = vpack.c.b16 %v124, %v123
    %v152 = vpack.c.b16 %v126, %v125
    %v153 = vpack.c.b16 %v128, %v127
    %v154 = vpack.c.b16 %v130, %v129
    %v155 = vpack.c.b16 %v132, %v131
    %v156 = vpack.c.b16 %v134, %v133
    %v157 = vpack.c.b16 %v136, %v135
    %v158 = vpack.c.b16 %v138, %v137
    %v159 = vpack.c.b16 %v140, %v139
    %v160 = vpack.c.b16 %v142, %v141
    %v161 = vpack.c.b16 %v144, %v143
    %v162 = vpack.c.b16 %v146, %v145
    %179 = vmatprep.subr.bf16.mxu0 0
    %180 = vmatpush1.bf16.msra.mxu0 %v154
    %181 = vmatprep.subr.bf16.mxu0 0
    %182 = vmatpush1.bf16.msra.mxu0 %v153
    %183 = vmatprep.subr.bf16.mxu0 0
    %184 = vmatpush1.bf16.msra.mxu0 %v152
    %185 = vmatprep.subr.bf16.mxu0 0
    %186 = vmatpush1.bf16.msra.mxu0 %v151
    %187 = vmatprep.subr.bf16.mxu0 0
    %188 = vmatpush1.bf16.msra.mxu0 %v150
    %189 = vmatprep.subr.bf16.mxu0 0
    %190 = vmatpush1.bf16.msra.mxu0 %v149
    %191 = vmatprep.subr.bf16.mxu0 0
    %192 = vmatpush1.bf16.msra.mxu0 %v148
    %193 = vmatprep.subr.bf16.mxu0 0
    %194 = vmatpush1.bf16.msra.mxu0 %v147
    %195 = vmatprep.subr.bf16.mxu0 0
    %196 = vmatpush2.bf16.msra.mxu0 %v162
    %197 = vmatprep.subr.bf16.mxu0 0
    %198 = vmatpush2.bf16.msra.mxu0 %v161
    %199 = vmatprep.subr.bf16.mxu0 0
    %200 = vmatpush2.bf16.msra.mxu0 %v160
    %201 = vmatprep.subr.bf16.mxu0 0
    %202 = vmatpush2.bf16.msra.mxu0 %v159
    %203 = vmatprep.subr.bf16.mxu0 0
    %204 = vmatpush2.bf16.msra.mxu0 %v158
    %205 = vmatprep.subr.bf16.mxu0 0
    %206 = vmatpush2.bf16.msra.mxu0 %v157
    %207 = vmatprep.subr.bf16.mxu0 0
    %208 = vmatpush2.bf16.msra.mxu0 %v156
    %209 = vmatprep.subr.bf16.mxu0 0
    %210 = vmatpush2.bf16.msra.mxu0 %v155
    %211 = vmatprep.mubr.bf16.mxu0 %v43
    %212 = vmatmul.mubr.bf16.gmra.mxu0 %v42
    %v213 = vpop.f32.mrf.mxu0
    %v214 = vadd.f32 %v81, %v213
    %v215 = vpop.f32.mrf.mxu0
    %v216 = vpop.f32.mrf.mxu0
    %v217 = vpop.f32.mrf.mxu0
    %218 = vdwg.mxu0
    %v219 = vmax.f32 %v214, 0.0
    %v220 = vpack.c.bf16 %v219, %v219
    %v221 = vld [vmem:[%s3] sm:$0xf]
    %v222 = vld [vmem:[%s3 + $0x4] sm:$0xf]
    %v223 = vld [vmem:[%s3 + $0x8] sm:$0xf]
    %v224 = vld [vmem:[%s3 + $0xc] sm:$0xf]
    %v225 = vld [vmem:[%s3 + $0x10] sm:$0xf]
    %v226 = vld [vmem:[%s3 + $0x14] sm:$0xf]
    %v227 = vld [vmem:[%s3 + $0x18] sm:$0xf]
    %v228 = vld [vmem:[%s3 + $0x1c] sm:$0xf]
    %v229 = vld [vmem:[%s3 + $0x20] sm:$0xf]
    %v230 = vld [vmem:[%s3 + $0x24] sm:$0xf]
    %v231 = vld [vmem:[%s3 + $0x28] sm:$0xf]
    %v232 = vld [vmem:[%s3 + $0x2c] sm:$0xf]
    %v233 = vld [vmem:[%s3 + $0x30] sm:$0xf]
    %v234 = vld [vmem:[%s3 + $0x34] sm:$0xf]
    %v235 = vld [vmem:[%s3 + $0x38] sm:$0xf]
    %v236 = vld [vmem:[%s3 + $0x3c] sm:$0xf]
    %v237 = vld [vmem:[%s4] sm:$0x1]
    %v239 = vlaneseq
    %v240 = vshrl.u32 %v239, 7
    %v241 = vsub.s32 0, %v240
    %v242 = vrot.slane %v237, %v241
    %v260 = vunpack.c.l.b16 %v221
    %v261 = vunpack.c.l.b16 %v222
    %v262 = vunpack.c.l.b16 %v223
    %v263 = vunpack.c.l.b16 %v224
    %v264 = vunpack.c.l.b16 %v225
    %v265 = vunpack.c.l.b16 %v226
    %v266 = vunpack.c.l.b16 %v227
    %v267 = vunpack.c.l.b16 %v228
    %v268 = vunpack.c.l.b16 %v229
    %v269 = vunpack.c.l.b16 %v230
    %v270 = vunpack.c.l.b16 %v231
    %v271 = vunpack.c.l.b16 %v232
    %v272 = vunpack.c.l.b16 %v233
    %v273 = vunpack.c.l.b16 %v234
    %v274 = vunpack.c.l.b16 %v235
    %v275 = vunpack.c.l.b16 %v236
    %v276 = vpack.c.b16 %v261, %v260
    %v277 = vpack.c.b16 %v263, %v262
    %v278 = vpack.c.b16 %v265, %v264
    %v279 = vpack.c.b16 %v267, %v266
    %v280 = vpack.c.b16 %v269, %v268
    %v281 = vpack.c.b16 %v271, %v270
    %v282 = vpack.c.b16 %v273, %v272
    %v283 = vpack.c.b16 %v275, %v274
    %292 = vmatprep.subr.bf16.mxu0 0
    %293 = vmatpush1.bf16.msra.mxu0 %v283
    %294 = vmatprep.subr.bf16.mxu0 0
    %295 = vmatpush1.bf16.msra.mxu0 %v282
    %296 = vmatprep.subr.bf16.mxu0 0
    %297 = vmatpush1.bf16.msra.mxu0 %v281
    %298 = vmatprep.subr.bf16.mxu0 0
    %299 = vmatpush1.bf16.msra.mxu0 %v280
    %300 = vmatprep.subr.bf16.mxu0 0
    %301 = vmatpush1.bf16.msra.mxu0 %v279
    %302 = vmatprep.subr.bf16.mxu0 0
    %303 = vmatpush1.bf16.msra.mxu0 %v278
    %304 = vmatprep.subr.bf16.mxu0 0
    %305 = vmatpush1.bf16.msra.mxu0 %v277
    %306 = vmatprep.subr.bf16.mxu0 0
    %307 = vmatpush1.bf16.msra.mxu0 %v276
    %308 = vmatprep.subr.bf16.mxu0 0
    %309 = vmatpush2.bf16.msra.mxu0 0
    %310 = vmatprep.subr.bf16.mxu0 0
    %311 = vmatpush2.bf16.msra.mxu0 0
    %312 = vmatprep.subr.bf16.mxu0 0
    %313 = vmatpush2.bf16.msra.mxu0 0
    %314 = vmatprep.subr.bf16.mxu0 0
    %315 = vmatpush2.bf16.msra.mxu0 0
    %316 = vmatprep.subr.bf16.mxu0 0
    %317 = vmatpush2.bf16.msra.mxu0 0
    %318 = vmatprep.subr.bf16.mxu0 0
    %319 = vmatpush2.bf16.msra.mxu0 0
    %320 = vmatprep.subr.bf16.mxu0 0
    %321 = vmatpush2.bf16.msra.mxu0 0
    %322 = vmatprep.subr.bf16.mxu0 0
    %323 = vmatpush2.bf16.msra.mxu0 0
    %324 = vmatprep.mubr.bf16.mxu0 0
    %325 = vmatmul.mubr.bf16.gmra.mxu0 %v220
    %v326 = vpop.f32.mrf.mxu0
    %v327 = vadd.f32 %v242, %v326
    %v328 = vpop.f32.mrf.mxu0
    %v329 = vpop.f32.mrf.mxu0
    %v330 = vpop.f32.mrf.mxu0
    %331 = vdwg.mxu0
    %v332 = vmax.f32 %v327, 0.0
    %v333 = vpack.c.bf16 %v332, %v332
    %v334 = vld [vmem:[%s5] sm:$0xf]
    %v335 = vld [vmem:[%s5 + $0x4] sm:$0xf]
    %v336 = vld [vmem:[%s5 + $0x8] sm:$0xf]
    %v337 = vld [vmem:[%s5 + $0xc] sm:$0xf]
    %v338 = vld [vmem:[%s5 + $0x10] sm:$0xf]
    %v339 = vld [vmem:[%s5 + $0x14] sm:$0xf]
    %v340 = vld [vmem:[%s5 + $0x18] sm:$0xf]
    %v341 = vld [vmem:[%s5 + $0x1c] sm:$0xf]
    %s342 = sld [smem:[#allocation2]]
    %v343 = vstv %s342
    %v352 = vunpack.c.l.b16 %v334
    %v353 = vunpack.c.l.b16 %v335
    %v354 = vunpack.c.l.b16 %v336
    %v355 = vunpack.c.l.b16 %v337
    %v356 = vunpack.c.l.b16 %v338
    %v357 = vunpack.c.l.b16 %v339
    %v358 = vunpack.c.l.b16 %v340
    %v359 = vunpack.c.l.b16 %v341
    %v360 = vpack.c.b16 %v353, %v352
    %v361 = vpack.c.b16 %v355, %v354
    %v362 = vpack.c.b16 %v357, %v356
    %v363 = vpack.c.b16 %v359, %v358
    %vm368 = vcmask 523264
    %v370 = vsel %vm368, %v333, 0
    %372 = vmatprep.subr.bf16.mxu0 0
    %373 = vmatpush1.bf16.msra.mxu0 0
    %374 = vmatprep.subr.bf16.mxu0 0
    %375 = vmatpush1.bf16.msra.mxu0 0
    %376 = vmatprep.subr.bf16.mxu0 0
    %377 = vmatpush1.bf16.msra.mxu0 0
    %378 = vmatprep.subr.bf16.mxu0 0
    %379 = vmatpush1.bf16.msra.mxu0 0
    %380 = vmatprep.subr.bf16.mxu0 0
    %381 = vmatpush1.bf16.msra.mxu0 %v363
    %382 = vmatprep.subr.bf16.mxu0 0
    %383 = vmatpush1.bf16.msra.mxu0 %v362
    %384 = vmatprep.subr.bf16.mxu0 0
    %385 = vmatpush1.bf16.msra.mxu0 %v361
    %386 = vmatprep.subr.bf16.mxu0 0
    %387 = vmatpush1.bf16.msra.mxu0 %v360
    %388 = vmatprep.subr.bf16.mxu0 0
    %389 = vmatpush2.bf16.msra.mxu0 0
    %390 = vmatprep.subr.bf16.mxu0 0
    %391 = vmatpush2.bf16.msra.mxu0 0
    %392 = vmatprep.subr.bf16.mxu0 0
    %393 = vmatpush2.bf16.msra.mxu0 0
    %394 = vmatprep.subr.bf16.mxu0 0
    %395 = vmatpush2.bf16.msra.mxu0 0
    %396 = vmatprep.subr.bf16.mxu0 0
    %397 = vmatpush2.bf16.msra.mxu0 0
    %398 = vmatprep.subr.bf16.mxu0 0
    %399 = vmatpush2.bf16.msra.mxu0 0
    %400 = vmatprep.subr.bf16.mxu0 0
    %401 = vmatpush2.bf16.msra.mxu0 0
    %402 = vmatprep.subr.bf16.mxu0 0
    %403 = vmatpush2.bf16.msra.mxu0 0
    %404 = vmatprep.mubr.bf16.mxu0 0
    %405 = vmatmul.mubr.bf16.gmra.mxu0 %v370
    %v406 = vpop.f32.mrf.mxu0
    %v407 = vadd.f32 %v343, %v406
    %v408 = vpop.f32.mrf.mxu0
    %v409 = vpop.f32.mrf.mxu0
    %v410 = vpop.f32.mrf.mxu0
    %411 = vdwg.mxu0
    %v412 = vxor.u32 %v407, 2147483648
    %v413 = vmul.f32 %v412, 1.442695
    %v414 = vpow.pop %v413
    %v415 = vadd.f32 %v414, 1.0
    %v416 = vrcp.pop %v415
    %v417 = vmul.f32 1.0, %v416
    %vm418 = vcmask 7168
    %419 = vst.msk [vmem:[%s7] sm:$0xff] %vm418, %v417
    // Predicated region
    $region34: #{tpu_custom_call.1} parent=1 // pred_check
      _
    $region35: #{tpu_custom_call.1} parent=1 // pred_check_branch
      %421 = sbr.rel (0) target = $region37
    $region36: #{tpu_custom_call.1} parent=1 // pred_region
      _
    $region37: #{tpu_custom_call.1} parent=1 // pred_fallthru
      _
    // Predicated region
    $region38: #{tpu_custom_call.1} parent=1 // pred_check
      _
    $region39: #{tpu_custom_call.1} parent=1 // pred_check_branch
      %423 = sbr.rel (0) target = $region41
    $region40: #{tpu_custom_call.1} parent=1 // pred_region
      _
    $region41: #{tpu_custom_call.1} parent=1 // pred_fallthru
      _
    %424 = vsyncpa [#allocation4], 1

</llo_original>
